<compile_context>
chip_gen: v6e
topology: v6e:2x2x1
jax: 0.10.0
libtpu: 0.0.40
codegen_flags: <defaults>
</compile_context>

<pallas_src>
import functools

import jax
import jax.numpy as jnp
from jax import lax
from jax.experimental import pallas as pl
from jax.experimental.pallas import tpu as pltpu


@functools.lru_cache(maxsize=None)
def _roll_matches_numpy() -> bool:
    """One-time tiny probe: does pltpu.roll follow np.roll's shift convention?

    The column shift of the depthwise conv is implemented with pltpu.roll; the
    probe pins down the rotation direction empirically so the kernel is robust
    to either convention.
    """
    def k(x_ref, o_ref):
        o_ref[...] = pltpu.roll(x_ref[...], shift=32, axis=1)

    x = jnp.broadcast_to(jnp.arange(256, dtype=jnp.float32), (8, 256))
    y = pl.pallas_call(
        k, out_shape=jax.ShapeDtypeStruct((8, 256), jnp.float32))(x)
    return bool(jnp.array_equal(y, jnp.roll(x, 32, axis=1)))


def _vmem_capacity_bytes() -> int:
    """Physical VMEM per TensorCore (fallback: v7x-sized 64 MiB)."""
    try:
        return int(pltpu.get_tpu_info().vmem_capacity_bytes)
    except Exception:
        return 64 * 1024 * 1024


def _dwconv_kernel(x_ref, w_ref, b_ref, o_ref, *, H, WC, RB, BT, TB, shifts):
    # x_ref : (TB, H, WC)   input frames, lane axis = W*C (lane dense)
    # w_ref : (9*RB, WC) f32 boundary-masked taps, pre-broadcast over RB rows;
    #                        tap (ky, kx) lives at rows [(ky*3+kx)*RB, +RB)
    # b_ref : (RB, WC)   f32 bias, pre-broadcast over RB rows
    # o_ref : (TB, H, WC)   output frames
    f32 = jnp.float32
    base = pl.program_id(0) * TB
    n_valid = jnp.minimum(TB, BT - base)     # skip padded frames in last block

    def frame_body(t, carry):
        # Static row-band loop keeps the live accumulator small.
        for r0 in range(0, H, RB):
            rb = min(RB, H - r0)

            # Three ky row-sets (rb, WC); frame top/bottom halo rows are zero
            # (handled with a zero-row concat only in the boundary bands).
            rows = []
            for ky in range(3):
                lo = r0 + ky - 1
                hi = lo + rb
                lo_c, hi_c = max(lo, 0), min(hi, H)
                if hi_c <= lo_c:                       # band fully out of frame
                    rows.append(jnp.zeros((rb, WC), f32))
                    continue
                r = x_ref[t, pl.ds(lo_c, hi_c - lo_c), :].astype(f32)
                if lo < lo_c:
                    r = jnp.concatenate(
                        [jnp.zeros((lo_c - lo, WC), f32), r], axis=0)
                if hi > hi_c:
                    r = jnp.concatenate(
                        [r, jnp.zeros((hi - hi_c, WC), f32)], axis=0)
                rows.append(r)

            acc = b_ref[pl.ds(0, rb), :]               # bias-initialized acc
            for kx in range(3):
                part = None
                for ky in range(3):
                    tap = (ky * 3 + kx) * RB
                    term = rows[ky] * w_ref[pl.ds(tap, rb), :]
                    part = term if part is None else part + term
                sh = shifts[kx]
                if sh:
                    # Single +/-C lane rotation (XLU) per off-center column
                    # tap; lanes that wrap around the frame edge carry zero
                    # contributions because the weights are boundary-masked.
                    part = pltpu.roll(part, shift=sh, axis=1)
                acc = acc + part
            o_ref[t, pl.ds(r0, rb), :] = acc.astype(o_ref.dtype)
        return carry

    lax.fori_loop(0, n_valid, frame_body, 0)


def dwconv_pallas(x_bnc, weight, bias, T, H, W):
    """x_bnc: (B, N, C) with N = T*H*W.  weight: (3, 3, C), bias: (C,)."""
    B, N, C = x_bnc.shape
    assert N == T * H * W
    BT = B * T
    WC = W * C
    dtype = x_bnc.dtype
    f32 = jnp.float32

    # (B, N, C) -> (B*T, H, W*C): pure row-major metadata reshape (no copy).
    x3 = x_bnc.reshape(BT, H, WC)

    # Row band: 8 rows (sublane-aligned) or the full (small) frame height.
    RB = max(1, min(H, 8))

    # ---- host-side weight prep --------------------------------------------
    # Tile per-channel taps across the W positions of the lane axis.  The tap
    # (ky, kx) is zeroed on lanes whose *output* column would fall outside the
    # frame (mask evaluated at the pre-roll lane) -> zero padding along W.
    lane_w = jnp.arange(WC) // C                          # column index / lane
    w_t = jnp.tile(weight.astype(f32), (1, 1, W))         # (3, 3, W*C)
    taps = []
    for ky in range(3):
        for kx in range(3):
            ok = (lane_w - (kx - 1) >= 0) & (lane_w - (kx - 1) < W)
            taps.append(jnp.where(ok, w_t[ky, kx, :], 0.0))
    w_flat = jnp.stack(taps, axis=0)                      # (9, W*C)
    # Pre-broadcast over RB rows so in-kernel tap operands are plain loads.
    w2d = jnp.broadcast_to(w_flat[:, None, :], (9, RB, WC)).reshape(9 * RB, WC)
    b2d = jnp.broadcast_to(
        jnp.tile(bias.astype(f32), (W,))[None, :], (RB, WC))

    # Static lane-shift amounts for the three kx taps (direction probed once).
    if _roll_matches_numpy():
        shifts = tuple((-(kx - 1) * C) % WC for kx in range(3))
    else:
        shifts = tuple(((kx - 1) * C) % WC for kx in range(3))

    # ---- block sizing / VMEM budgeting -------------------------------------
    cap = _vmem_capacity_bytes()
    itemsize = jnp.dtype(dtype).itemsize
    frame_bytes = H * WC * itemsize
    const_bytes = (9 * RB * WC + RB * WC) * 4             # weights + bias, f32
    budget = max(4 * 1024 * 1024, int(cap * 0.4))
    avail = max(4 * frame_bytes, budget - 2 * const_bytes)
    TB = max(1, min(BT, avail // (4 * frame_bytes)))      # 2 bufs x (in + out)
    if BT > 1 and pl.cdiv(BT, TB) < 2:
        TB = pl.cdiv(BT, 2)      # >=2 grid steps so both v7x cores get work
    vmem_limit = max(32 * 1024 * 1024,
                     min(int(cap * 3 // 4), 112 * 1024 * 1024))

    kernel = functools.partial(_dwconv_kernel, H=H, WC=WC, RB=RB,
                               BT=BT, TB=TB, shifts=shifts)

    out = pl.pallas_call(
        kernel,
        out_shape=jax.ShapeDtypeStruct((BT, H, WC), dtype),
        grid_spec=pltpu.PrefetchScalarGridSpec(
            num_scalar_prefetch=0,
            grid=(pl.cdiv(BT, TB),),
            in_specs=[
                pl.BlockSpec((TB, H, WC), lambda i: (i, 0, 0)),
                pl.BlockSpec((9 * RB, WC), lambda i: (0, 0)),
                pl.BlockSpec((RB, WC), lambda i: (0, 0)),
            ],
            out_specs=pl.BlockSpec((TB, H, WC), lambda i: (i, 0, 0)),
        ),
        compiler_params=pltpu.CompilerParams(
            dimension_semantics=("parallel",),
            vmem_limit_bytes=vmem_limit),
    )(x3, w2d, b2d)

    # PyTorch tail (reshape/permute/flatten/transpose) == token order
    # n = t*H*W + h*W + w with channels last, i.e. a plain reshape here.
    return out.reshape(B, N, C)


def dwconv_reference(x_bnc, weight, bias, T, H, W):
    """Pure-JAX reference (matches nn.Conv2d(dim, dim, 3, 1, 1, groups=dim))."""
    B, N, C = x_bnc.shape
    x = x_bnc.reshape(B * T, H, W, C)
    w = weight.reshape(3, 3, 1, C)  # HWIO with feature_group_count=C
    y = lax.conv_general_dilated(
        x, w, window_strides=(1, 1), padding=((1, 1), (1, 1)),
        dimension_numbers=("NHWC", "HWIO", "NHWC"),
        feature_group_count=C)
    y = y + bias[None, None, None, :]
    return y.reshape(B, T * H * W, C)


if __name__ == "__main__":
    # Small shapes consistent with the module's forward: x is (B, N, C),
    # N = T*H*W.  (Production dims: C in {64,...,768}; layout generalizes.)
    B, T, H, W, C = 2, 2, 8, 8, 32
    N = T * H * W

    key = jax.random.PRNGKey(0)
    k_x, k_w, k_b = jax.random.split(key, 3)
    x = jax.random.normal(k_x, (B, N, C), dtype=jnp.float32)
    # nn.Conv2d(dim, dim, 3, groups=dim) weight is (dim, 1, 3, 3); we store it
    # channels-last as (3, 3, dim).  Deterministic synthetic init.
    weight = jax.random.normal(k_w, (3, 3, C), dtype=jnp.float32) * 0.1
    bias = jax.random.normal(k_b, (C,), dtype=jnp.float32) * 0.1

    out = dwconv_pallas(x, weight, bias, T, H, W)
    out = jax.block_until_ready(out)

    ref = dwconv_reference(x, weight, bias, T, H, W)
    assert out.shape == (B, N, C)
    assert jnp.allclose(out, ref, atol=1e-5, rtol=1e-5), "mismatch vs reference"

    print("KERNEL_OK")
</pallas_src>

<mosaic_0001>
module attributes {stable_mosaic.version = 11 : i64} {
  func.func @k(%arg0: memref<8x256xf32, #tpu.memory_space<vmem>>, %arg1: memref<8x256xf32, #tpu.memory_space<vmem>>) attributes {dimension_semantics = [], scalar_prefetch = 0 : i64, scratch_operands = 0 : i64, tpu.core_type = #tpu.core_type<tc>} {
    %c0 = arith.constant 0 : index
    %c0_0 = arith.constant 0 : index
    %0 = vector.load %arg0[%c0, %c0_0] : memref<8x256xf32, #tpu.memory_space<vmem>>, vector<8x256xf32>
    %c32_i32 = arith.constant 32 : i32
    %1 = tpu.dynamic_rotate %0 by %c32_i32 dim 1 : vector<8x256xf32>, i32 -> vector<8x256xf32>
    %c0_1 = arith.constant 0 : index
    %c0_2 = arith.constant 0 : index
    %2 = vector.load %arg1[%c0_1, %c0_2] : memref<8x256xf32, #tpu.memory_space<vmem>>, vector<8x256xf32>
    tpu.vector_store %arg1[%c0_1, %c0_2], %1 {strides = array<i32>} : memref<8x256xf32, #tpu.memory_space<vmem>>, vector<8x256xf32>,
    return
  }
}

</mosaic_0001>

<llo_original>
// kernel: tpu_custom_call.1
$region0: #{tpu_custom_call.1}
  #allocation0 [shape = 'u32[]', space=smem, size = 0x4, offset = 0x4, fixed_abs, tag = 'smem constant byte address 0x4 - core index']
  #allocation1 [shape = 'u32[144,128]{1,0:T(1,128)}', space=vmem, size = 0x12000, scoped, tag = 'internal scratch']
  %s0 = inlined_call_operand.hbm [shape: f32[8,256], index: 0, kind: input, shape index: {}]
  %s1 = inlined_call_operand.hbm [shape: f32[8,256], index: 1, kind: output, shape index: {}]
  %s2 = sld [smem:[#allocation0]]
  $region18: #{tpu_custom_call.1} parent=0
    _
  %s4 = ssub.s32 1, %s2
  %s5 = scalar_select 0, %s4, %s2
  $region1: #{tpu_custom_call.1} parent=0
    #allocation2 [shape = 'u8[8192]{0}', space=vmem, size = 0x2000, scoped, tag = 'input window, operand 0, single buffered']
    #allocation3 [shape = 's32[1]{0}', space=sflag, size = 0x4, scoped, tag = 'scoped memory for tpu_custom_call.1']
    #allocation4 [shape = 's32[1]{0}', space=sflag, size = 0x4, scoped, tag = 'scoped memory for tpu_custom_call.1']
    #allocation5 [shape = 'u8[8192]{0}', space=vmem, size = 0x2000, scoped, tag = 'output window, operand 0, single buffered']
    %6 = vsyncpa [#allocation3], 0
    %7 = vsyncpa [#allocation4], 0
    // Predicated region
    $region2: #{tpu_custom_call.1} parent=1 // pred_check
      _
    $region3: #{tpu_custom_call.1} parent=1 // pred_check_branch
      %9 = sbr.rel (0) target = $region5
    $region4: #{tpu_custom_call.1} parent=1 // pred_region
      %s11 = ssub.s32 256, 256
      %12 = vsyncadd [#allocation3], %s11
      %s14 = sshll.u32 [#allocation2], 4
      %s15 = int_to_ptr.vmem [resolvable:$true] %s14
      %17 = dma.hbm_to_vmem [thread:$0]  %s0, 256, %s15, [#allocation3]
    $region5: #{tpu_custom_call.1} parent=1 // pred_fallthru
      _
    // Predicated region
    $region6: #{tpu_custom_call.1} parent=1 // pred_check
      _
    $region7: #{tpu_custom_call.1} parent=1 // pred_check_branch
      %19 = sbr.rel (0) target = $region9
    $region8: #{tpu_custom_call.1} parent=1 // pred_region
      %20 = dma.done [#allocation3], 256
    $region9: #{tpu_custom_call.1} parent=1 // pred_fallthru
      _
    %v21 = vld [vmem:[#allocation2] sm:$0xff]
    %v22 = vld [vmem:[#allocation2 + $0x8] sm:$0xff]
    %23 = vrot.lane.b32.xlu0 %v21, 32
    %v24 = vpop.permute.xlu0 %23
    %25 = vrot.lane.b32.xlu0 %v22, 32
    %v26 = vpop.permute.xlu0 %25
    %v27 = vlaneseq
    %v28 = vand.u32 %v27, 127
    %vm29 = vcmp.lt.s32.totalorder %v28, 32
    %v30 = vsel %vm29, %v24, %v26
    %v31 = vsel %vm29, %v26, %v24
    %32 = vst [vmem:[#allocation5] sm:$0xff] %v31
    %33 = vst [vmem:[#allocation5 + $0x8] sm:$0xff] %v30
    // Predicated region
    $region10: #{tpu_custom_call.1} parent=1 // pred_check
      _
    $region11: #{tpu_custom_call.1} parent=1 // pred_check_branch
      %35 = sbr.rel (0) target = $region13
    $region12: #{tpu_custom_call.1} parent=1 // pred_region
      %s37 = ssub.s32 256, 256
      %38 = vsyncadd [#allocation4], %s37
      %s40 = sshll.u32 [#allocation5], 4
      %s41 = int_to_ptr.vmem [resolvable:$true] %s40
      %43 = dma.vmem_to_hbm [thread:$0]  %s41, 256, %s1, [#allocation4]
    $region13: #{tpu_custom_call.1} parent=1 // pred_fallthru
      _
    // Predicated region
    $region14: #{tpu_custom_call.1} parent=1 // pred_check
      _
    $region15: #{tpu_custom_call.1} parent=1 // pred_check_branch
      %45 = sbr.rel (0) target = $region17
    $region16: #{tpu_custom_call.1} parent=1 // pred_region
      %46 = dma.done [#allocation4], 256
    $region17: #{tpu_custom_call.1} parent=1 // pred_fallthru
      _
    %47 = vsyncpa [#allocation3], 1
    %48 = vsyncpa [#allocation4], 1

</llo_original>
